<compile_context>
chip_gen: v6e
topology: v6e:2x2x1
jax: 0.10.0
libtpu: 0.0.40
codegen_flags: <defaults>
</compile_context>

<pallas_src>
import jax
import jax.numpy as jnp
from jax import lax
from jax.experimental import pallas as pl
from jax.experimental.pallas import tpu as pltpu


IN_F, HID_F, OUT_F = 7, 14, 3

# Inner lane sub-chunk width (multiple of 128): intermediates live only at this
# width so they stay in vregs instead of round-tripping VMEM.
CHUNK = 1024
# Max lanes per grid step (keeps per-step VMEM small on v7x, >=2 steps for big B).
TILE_B_MAX = 32 * 1024

# Packed-parameter block: one (48, 16) f32 array, one DMA, VMEM-resident.
#   rows  0:14, lanes 0:7   -> W1 (14,7) ; lane 7  -> b1
#   rows 16:30, lanes 0:14  -> W2 (14,14); lane 14 -> b2
#   rows 32:35, lanes 0:14  -> W3 (3,14) ; lane 14 -> b3
# Layer row offsets are multiples of 8 so the in-kernel sublane slices are aligned.
_P_ROWS, _P_COLS = 48, 16
_L1_R, _L2_R, _L3_R = 0, 16, 32


def mlp_kernel(xt_ref, p_ref, ot_ref):
    """Fused 3-layer MLP on a feature-major batch tile.

    xt_ref: (7, tile_b) f32    p_ref: (48, 16) f32 packed params
    ot_ref: (3, tile_b) f32
    """
    # One-time reads of the packed, VMEM-resident parameters. Weights go to
    # bf16 (single-pass MXU); biases stay f32 for the f32 accumulator add.
    w1 = p_ref[_L1_R:_L1_R + HID_F, 0:IN_F].astype(jnp.bfloat16)        # (14, 7)
    b1 = p_ref[_L1_R:_L1_R + HID_F, IN_F:IN_F + 1]                      # (14, 1)
    w2 = p_ref[_L2_R:_L2_R + HID_F, 0:HID_F].astype(jnp.bfloat16)       # (14, 14)
    b2 = p_ref[_L2_R:_L2_R + HID_F, HID_F:HID_F + 1]                    # (14, 1)
    w3 = p_ref[_L3_R:_L3_R + OUT_F, 0:HID_F].astype(jnp.bfloat16)       # (3, 14)
    b3 = p_ref[_L3_R:_L3_R + OUT_F, HID_F:HID_F + 1]                    # (3, 1)

    n_chunks = xt_ref.shape[1] // CHUNK   # static: tile_b is a multiple of CHUNK

    def body(c, carry):
        off = pl.multiple_of(c * CHUNK, CHUNK)
        x = xt_ref[:, pl.ds(off, CHUNK)].astype(jnp.bfloat16)            # (7, C)
        h1 = jnp.dot(w1, x, preferred_element_type=jnp.float32) + b1     # (14, C)
        h1 = jnp.maximum(h1, 0.0).astype(jnp.bfloat16)
        h2 = jnp.dot(w2, h1, preferred_element_type=jnp.float32) + b2    # (14, C)
        h2 = jnp.maximum(h2, 0.0).astype(jnp.bfloat16)
        y = jnp.dot(w3, h2, preferred_element_type=jnp.float32) + b3     # (3, C)
        ot_ref[:, pl.ds(off, CHUNK)] = y
        return carry

    # Fully unrolled in-kernel loop (<= 32 chunks) -> LLO sees the whole body.
    lax.fori_loop(0, n_chunks, body, 0, unroll=True)


def _round_up(x, m):
    return ((x + m - 1) // m) * m


def pack_params(params):
    """Pack W1,b1,W2,b2,W3,b3 into a single (48, 16) f32 VMEM-resident block."""
    p = jnp.zeros((_P_ROWS, _P_COLS), jnp.float32)
    p = p.at[_L1_R:_L1_R + HID_F, 0:IN_F].set(params["w1"].astype(jnp.float32))
    p = p.at[_L1_R:_L1_R + HID_F, IN_F].set(
        jnp.asarray(params["b1"], jnp.float32).reshape(-1))
    p = p.at[_L2_R:_L2_R + HID_F, 0:HID_F].set(params["w2"].astype(jnp.float32))
    p = p.at[_L2_R:_L2_R + HID_F, HID_F].set(
        jnp.asarray(params["b2"], jnp.float32).reshape(-1))
    p = p.at[_L3_R:_L3_R + OUT_F, 0:HID_F].set(params["w3"].astype(jnp.float32))
    p = p.at[_L3_R:_L3_R + OUT_F, HID_F].set(
        jnp.asarray(params["b3"], jnp.float32).reshape(-1))
    return p


def net_forward_t(x_t, params):
    """Feature-major forward: x_t (7, B) f32 -> (3, B) f32 (Pallas fast path)."""
    f, b = x_t.shape
    assert f == IN_F
    packed = pack_params(params)

    # >= 2 grid steps whenever possible so v7x's two TensorCores both get work
    # via the "parallel" grid axis. tile_b is a multiple of CHUNK, so the lane
    # dim is dense (unmasked stores) and the in-kernel sub-chunk loop is exact.
    n_steps = max(2, pl.cdiv(b, TILE_B_MAX))
    tile_b = min(TILE_B_MAX, _round_up(pl.cdiv(b, n_steps), CHUNK))
    grid_b = pl.cdiv(b, tile_b)
    b_pad = grid_b * tile_b
    if b_pad != b:
        # Pad the batch (lane) axis so every grid step sees a full, dense tile.
        x_t = jnp.pad(x_t, ((0, 0), (0, b_pad - b)))

    flops = 2 * (IN_F * HID_F + HID_F * HID_F + HID_F * OUT_F) * b_pad
    bytes_accessed = 4 * ((IN_F + OUT_F) * b_pad + _P_ROWS * _P_COLS)

    out_t = pl.pallas_call(
        mlp_kernel,
        out_shape=jax.ShapeDtypeStruct((OUT_F, b_pad), jnp.float32),
        grid=(grid_b,),
        in_specs=[
            pl.BlockSpec((IN_F, tile_b), lambda i: (0, i)),       # pipelined x tile
            pl.BlockSpec((_P_ROWS, _P_COLS), lambda i: (0, 0)),   # resident params
        ],
        out_specs=pl.BlockSpec((OUT_F, tile_b), lambda i: (0, i)),
        compiler_params=pltpu.CompilerParams(
            dimension_semantics=("parallel",),        # megacore split on v7x
            vmem_limit_bytes=32 * 1024 * 1024,
        ),
        cost_estimate=pl.CostEstimate(
            flops=int(flops), transcendentals=0, bytes_accessed=int(bytes_accessed)
        ),
    )(x_t, packed)

    if b_pad != b:
        out_t = out_t[:, :b]
    return out_t


def net_forward(x, params):
    """Module-compatible forward: x (B, 7) -> (B, 3).

    The boundary transposes are small XLA ops outside the kernel; for large,
    memory-bound batches feed feature-major data to `net_forward_t` directly.
    """
    # TODO(synk): fuse the batch-major <-> feature-major transposes into the
    # kernel (XLU) if the wrapper transposes ever dominate end-to-end time.
    return net_forward_t(x.T, params).T


def init_params(key):
    """Deterministic init mirroring nn.Linear (torch (out, in) weight layout)."""
    ks = jax.random.split(key, 6)

    def linear(kw, kb, fan_in, fan_out):
        bound = 1.0 / jnp.sqrt(jnp.float32(fan_in))
        w = jax.random.uniform(kw, (fan_out, fan_in), jnp.float32, -bound, bound)
        b = jax.random.uniform(kb, (fan_out,), jnp.float32, -bound, bound)
        return w, b

    w1, b1 = linear(ks[0], ks[1], IN_F, HID_F)
    w2, b2 = linear(ks[2], ks[3], HID_F, HID_F)
    w3, b3 = linear(ks[4], ks[5], HID_F, OUT_F)
    return {"w1": w1, "b1": b1, "w2": w2, "b2": b2, "w3": w3, "b3": b3}


def reference_forward_f32(x, params):
    """Pure-JAX f32 reference of the torch forward: x (B, 7) -> (B, 3)."""
    h = jnp.maximum(x @ params["w1"].T + params["b1"], 0.0)
    h = jnp.maximum(h @ params["w2"].T + params["b2"], 0.0)
    return h @ params["w3"].T + params["b3"]


def reference_forward_bf16(x, params):
    """Same math with bf16 matmul operands / f32 accumulation (kernel numerics)."""
    def dot(a, w):
        return jnp.dot(a.astype(jnp.bfloat16), w.T.astype(jnp.bfloat16),
                       preferred_element_type=jnp.float32)
    h = jnp.maximum(dot(x, params["w1"]) + params["b1"], 0.0)
    h = jnp.maximum(dot(h, params["w2"]) + params["b2"], 0.0)
    return dot(h, params["w3"]) + params["b3"]


if __name__ == "__main__":
    key = jax.random.PRNGKey(0)
    kp, kx1, kx2 = jax.random.split(key, 3)
    params = init_params(kp)

    # 1) Small, module-shaped check: (B, 7) -> (B, 3) (single grid step).
    B_small = 8
    x_small = jax.random.normal(kx1, (B_small, IN_F), dtype=jnp.float32)
    out_small = jax.block_until_ready(net_forward(x_small, params))
    assert out_small.shape == (B_small, OUT_F)
    assert jnp.allclose(out_small, reference_forward_bf16(x_small, params),
                        atol=2e-3, rtol=2e-3), "small batch: mismatch vs bf16 reference"
    assert jnp.allclose(out_small, reference_forward_f32(x_small, params),
                        atol=1e-1, rtol=1e-1), "small batch: mismatch vs f32 reference"

    # 2) Feature-major batch exercising the 2-step "parallel" grid, the
    #    lane-padding path and the in-kernel sub-chunk loop.
    B_med = 2500                       # -> tile 2048, grid (2,), pad to 4096
    xt_med = jax.random.normal(kx2, (IN_F, B_med), dtype=jnp.float32)
    out_med = jax.block_until_ready(net_forward_t(xt_med, params))
    assert out_med.shape == (OUT_F, B_med)
    assert jnp.allclose(out_med, reference_forward_bf16(xt_med.T, params).T,
                        atol=2e-3, rtol=2e-3), "medium batch: mismatch vs bf16 reference"
    assert jnp.allclose(out_med, reference_forward_f32(xt_med.T, params).T,
                        atol=1e-1, rtol=1e-1), "medium batch: mismatch vs f32 reference"

    print("KERNEL_OK")
</pallas_src>

<mosaic_0001>
module attributes {stable_mosaic.version = 11 : i64} {
  func.func @mlp_kernel(%arg0: i32, %arg1: memref<7x1024xf32, #tpu.memory_space<vmem>>, %arg2: memref<48x16xf32, #tpu.memory_space<vmem>>, %arg3: memref<3x1024xf32, #tpu.memory_space<vmem>>) attributes {dimension_semantics = [#tpu.dimension_semantics<parallel>], iteration_bounds = array<i64: 1>, scalar_prefetch = 0 : i64, scratch_operands = 0 : i64, tpu.core_type = #tpu.core_type<tc>, window_params = [{transform_indices = @transform_0, window_bounds = array<i64: 7, 1024>}, {pipeline_mode = #tpu.pipeline_mode<synchronous>, transform_indices = @transform_1, window_bounds = array<i64: 48, 16>}, {transform_indices = @transform_2, window_bounds = array<i64: 3, 1024>}]} {
    %c0 = arith.constant 0 : index
    %c0_0 = arith.constant 0 : index
    %0 = vector.load %arg2[%c0, %c0_0] : memref<48x16xf32, #tpu.memory_space<vmem>>, vector<14x7xf32>
    %1 = arith.truncf %0 : vector<14x7xf32> to vector<14x7xbf16>
    %c0_1 = arith.constant 0 : index
    %c7 = arith.constant 7 : index
    %2 = vector.load %arg2[%c0_1, %c7] : memref<48x16xf32, #tpu.memory_space<vmem>>, vector<14x1xf32>
    %c16 = arith.constant 16 : index
    %c0_2 = arith.constant 0 : index
    %3 = vector.load %arg2[%c16, %c0_2] : memref<48x16xf32, #tpu.memory_space<vmem>>, vector<14x14xf32>
    %4 = arith.truncf %3 : vector<14x14xf32> to vector<14x14xbf16>
    %c16_3 = arith.constant 16 : index
    %c14 = arith.constant 14 : index
    %5 = vector.load %arg2[%c16_3, %c14] : memref<48x16xf32, #tpu.memory_space<vmem>>, vector<14x1xf32>
    %c32 = arith.constant 32 : index
    %c0_4 = arith.constant 0 : index
    %6 = vector.load %arg2[%c32, %c0_4] : memref<48x16xf32, #tpu.memory_space<vmem>>, vector<3x14xf32>
    %7 = arith.truncf %6 : vector<3x14xf32> to vector<3x14xbf16>
    %c32_5 = arith.constant 32 : index
    %c14_6 = arith.constant 14 : index
    %8 = vector.load %arg2[%c32_5, %c14_6] : memref<48x16xf32, #tpu.memory_space<vmem>>, vector<3x1xf32>
    %c0_i32 = arith.constant 0 : i32
    %c1024_i32 = arith.constant 1024 : i32
    %9 = arith.muli %c0_i32, %c1024_i32 : i32
    %10 = tpu.assume_multiple %9, 1024 : i32
    %c0_7 = arith.constant 0 : index
    %11 = arith.index_cast %10 : i32 to index
    %12 = vector.load %arg1[%c0_7, %11] : memref<7x1024xf32, #tpu.memory_space<vmem>>, vector<7x1024xf32>
    %13 = arith.truncf %12 : vector<7x1024xf32> to vector<7x1024xbf16>
    %cst = arith.constant dense<0.000000e+00> : vector<14x1024xf32>
    %14 = tpu.matmul %1, %13, %cst {dimension_numbers = #tpu.dot_dimension_numbers<[1], [0], [0], [1], [0, 0, 1, 1], [], []>} : vector<14x7xbf16>, vector<7x1024xbf16>, vector<14x1024xf32> -> vector<14x1024xf32>
    %15 = vector.broadcast %2 : vector<14x1xf32> to vector<14x1024xf32>
    %16 = arith.addf %14, %15 : vector<14x1024xf32>
    %cst_8 = arith.constant 0.000000e+00 : f32
    %17 = vector.broadcast %cst_8 : f32 to vector<14x1024xf32>
    %18 = arith.maximumf %16, %17 : vector<14x1024xf32>
    %19 = arith.truncf %18 : vector<14x1024xf32> to vector<14x1024xbf16>
    %cst_9 = arith.constant dense<0.000000e+00> : vector<14x1024xf32>
    %20 = tpu.matmul %4, %19, %cst_9 {dimension_numbers = #tpu.dot_dimension_numbers<[1], [0], [0], [1], [0, 0, 1, 1], [], []>} : vector<14x14xbf16>, vector<14x1024xbf16>, vector<14x1024xf32> -> vector<14x1024xf32>
    %21 = vector.broadcast %5 : vector<14x1xf32> to vector<14x1024xf32>
    %22 = arith.addf %20, %21 : vector<14x1024xf32>
    %cst_10 = arith.constant 0.000000e+00 : f32
    %23 = vector.broadcast %cst_10 : f32 to vector<14x1024xf32>
    %24 = arith.maximumf %22, %23 : vector<14x1024xf32>
    %25 = arith.truncf %24 : vector<14x1024xf32> to vector<14x1024xbf16>
    %cst_11 = arith.constant dense<0.000000e+00> : vector<3x1024xf32>
    %26 = tpu.matmul %7, %25, %cst_11 {dimension_numbers = #tpu.dot_dimension_numbers<[1], [0], [0], [1], [0, 0, 1, 1], [], []>} : vector<3x14xbf16>, vector<14x1024xbf16>, vector<3x1024xf32> -> vector<3x1024xf32>
    %27 = vector.broadcast %8 : vector<3x1xf32> to vector<3x1024xf32>
    %28 = arith.addf %26, %27 : vector<3x1024xf32>
    %c0_12 = arith.constant 0 : index
    %29 = arith.index_cast %10 : i32 to index
    %30 = vector.load %arg3[%c0_12, %29] : memref<3x1024xf32, #tpu.memory_space<vmem>>, vector<3x1024xf32>
    tpu.vector_store %arg3[%c0_12, %29], %28 {strides = array<i32>} : memref<3x1024xf32, #tpu.memory_space<vmem>>, vector<3x1024xf32>,
    %c1_i32 = arith.constant 1 : i32
    return
  }
  func.func @transform_0(%arg0: i32) -> (i32, i32) {
    %c0_i32 = arith.constant 0 : i32
    %c0_i32_0 = arith.constant 0 : i32
    return %c0_i32, %arg0 : i32, i32
  }
  func.func @transform_1(%arg0: i32) -> (i32, i32) {
    %c0_i32 = arith.constant 0 : i32
    %c0_i32_0 = arith.constant 0 : i32
    %c0_i32_1 = arith.constant 0 : i32
    return %c0_i32, %c0_i32_0 : i32, i32
  }
  func.func @transform_2(%arg0: i32) -> (i32, i32) {
    %c0_i32 = arith.constant 0 : i32
    %c0_i32_0 = arith.constant 0 : i32
    return %c0_i32, %arg0 : i32, i32
  }
}

</mosaic_0001>

<llo_original>
// kernel: tpu_custom_call.1
$region0: #{tpu_custom_call.1}
  #allocation0 [shape = 'u32[]', space=smem, size = 0x4, offset = 0x4, fixed_abs, tag = 'smem constant byte address 0x4 - core index']
  #allocation1 [shape = 'u32[144,128]{1,0:T(1,128)}', space=vmem, size = 0x12000, scoped, tag = 'internal scratch']
  %s0 = inlined_call_operand.vmem [shape: f32[7,1024], index: 0, kind: input, shape index: {}]
  %s1 = inlined_call_operand.vmem [shape: f32[48,16], index: 1, kind: input, shape index: {}]
  %s2 = inlined_call_operand.hbm [shape: f32[3,1024], index: 2, kind: output, shape index: {}]
  %s3 = sld [smem:[#allocation0]]
  $region18: #{tpu_custom_call.1} parent=0
    _
  %s5 = ssub.s32 1, %s3
  %s6 = scalar_select 0, %s5, %s3
  $region1: #{tpu_custom_call.1} parent=0
    #allocation2 [shape = 'u8[16384]{0}', space=vmem, size = 0x4000, scoped, tag = 'output window, operand 0, single buffered']
    #allocation3 [shape = 's32[1]{0}', space=sflag, size = 0x4, scoped, tag = 'scoped memory for tpu_custom_call.1']
    %7 = vsyncpa [#allocation3], 0
    // Predicated region
    $region2: #{tpu_custom_call.1} parent=1 // pred_check
      _
    $region3: #{tpu_custom_call.1} parent=1 // pred_check_branch
      %9 = sbr.rel (0) target = $region5
    $region4: #{tpu_custom_call.1} parent=1 // pred_region
      _
    $region5: #{tpu_custom_call.1} parent=1 // pred_fallthru
      _
    // Predicated region
    $region6: #{tpu_custom_call.1} parent=1 // pred_check
      _
    $region7: #{tpu_custom_call.1} parent=1 // pred_check_branch
      %11 = sbr.rel (0) target = $region9
    $region8: #{tpu_custom_call.1} parent=1 // pred_region
      _
    $region9: #{tpu_custom_call.1} parent=1 // pred_fallthru
      _
    %v13 = vld [vmem:[%s1] sm:$0xff]
    %v14 = vld [vmem:[%s1 + $0x8] sm:$0x3f]
    %v15 = vpack.c.bf16 %v14, %v13
    %v16 = vld [vmem:[%s1 + $0x10] sm:$0xff]
    %v17 = vld [vmem:[%s1 + $0x18] sm:$0x3f]
    %v18 = vpack.c.bf16 %v17, %v16
    %v19 = vld [vmem:[%s1 + $0x20] sm:$0x7]
    %v20 = vpack.c.bf16 %v19, %v19
    %v21 = vld [vmem:[%s0] sm:$0x7f]
    %v22 = vld [vmem:[%s0 + $0x8] sm:$0x7f]
    %v23 = vld [vmem:[%s0 + $0x10] sm:$0x7f]
    %v24 = vld [vmem:[%s0 + $0x18] sm:$0x7f]
    %v25 = vld [vmem:[%s0 + $0x20] sm:$0x7f]
    %v26 = vld [vmem:[%s0 + $0x28] sm:$0x7f]
    %v27 = vld [vmem:[%s0 + $0x30] sm:$0x7f]
    %v28 = vld [vmem:[%s0 + $0x38] sm:$0x7f]
    %v29 = vpack.c.bf16 %v21, %v21
    %v30 = vpack.c.bf16 %v22, %v22
    %v31 = vpack.c.bf16 %v23, %v23
    %v32 = vpack.c.bf16 %v24, %v24
    %v33 = vpack.c.bf16 %v25, %v25
    %v34 = vpack.c.bf16 %v26, %v26
    %v35 = vpack.c.bf16 %v27, %v27
    %v36 = vpack.c.bf16 %v28, %v28
    %38 = vset.pattern.permute.xlu0 7
    %39 = vperm.xlu0 %38, %v13
    %v40 = vpop.permute.xlu0 %39
    %43 = vset.pattern.permute.xlu0 7
    %44 = vperm.xlu0 %43, %v14
    %v45 = vpop.permute.xlu0 %44
    %vm47 = vcmask 56320
    %v49 = vsel %vm47, %v15, 0
    %vm51 = vcmask 1042432
    %vm52 = vcmask 1043456
    %v53 = vsel %vm51, 4294967295, 65535
    %v54 = vsel %vm52, %v53, 0
    %v56 = vand.u32 %v29, %v54
    %v59 = vand.u32 %v30, %v54
    %v62 = vand.u32 %v31, %v54
    %v65 = vand.u32 %v32, %v54
    %v68 = vand.u32 %v33, %v54
    %v71 = vand.u32 %v34, %v54
    %v74 = vand.u32 %v35, %v54
    %v77 = vand.u32 %v36, %v54
    %79 = vmatprep.subr.bf16.mxu0 0
    %80 = vmatpush1.bf16.msra.mxu0 0
    %81 = vmatprep.subr.bf16.mxu0 0
    %82 = vmatpush1.bf16.msra.mxu0 0
    %83 = vmatprep.subr.bf16.mxu0 0
    %84 = vmatpush1.bf16.msra.mxu0 0
    %85 = vmatprep.subr.bf16.mxu0 0
    %86 = vmatpush1.bf16.msra.mxu0 0
    %87 = vmatprep.subr.bf16.mxu0 0
    %88 = vmatpush1.bf16.msra.mxu0 0
    %89 = vmatprep.subr.bf16.mxu0 0
    %90 = vmatpush1.bf16.msra.mxu0 0
    %91 = vmatprep.subr.bf16.mxu0 0
    %92 = vmatpush1.bf16.msra.mxu0 0
    %93 = vmatprep.subr.bf16.mxu0 %v59
    %94 = vmatpush1.bf16.msra.mxu0 %v56
    %95 = vmatprep.subr.bf16.mxu0 0
    %96 = vmatpush2.bf16.msra.mxu0 0
    %97 = vmatprep.subr.bf16.mxu0 0
    %98 = vmatpush2.bf16.msra.mxu0 0
    %99 = vmatprep.subr.bf16.mxu0 0
    %100 = vmatpush2.bf16.msra.mxu0 0
    %101 = vmatprep.subr.bf16.mxu0 0
    %102 = vmatpush2.bf16.msra.mxu0 0
    %103 = vmatprep.subr.bf16.mxu0 0
    %104 = vmatpush2.bf16.msra.mxu0 0
    %105 = vmatprep.subr.bf16.mxu0 0
    %106 = vmatpush2.bf16.msra.mxu0 0
    %107 = vmatprep.subr.bf16.mxu0 0
    %108 = vmatpush2.bf16.msra.mxu0 0
    %109 = vmatprep.subr.bf16.mxu0 0
    %110 = vmatpush2.bf16.msra.mxu0 0
    %111 = vmatprep.mubr.bf16.mxu0 0
    %112 = vmatmul.mubr.bf16.gmra.mxu0 %v49
    %v113 = vpop.f32.mrf.mxu0
    %v114 = vadd.f32 %v40, %v113
    %v115 = vpop.f32.mrf.mxu0
    %v116 = vadd.f32 %v40, %v115
    %v117 = vpop.f32.mrf.mxu0
    %v118 = vadd.f32 %v45, %v117
    %v119 = vpop.f32.mrf.mxu0
    %v120 = vadd.f32 %v45, %v119
    %121 = vdwg.mxu0
    %122 = vmatprep.subr.bf16.mxu0 0
    %123 = vmatpush1.bf16.msra.mxu0 0
    %124 = vmatprep.subr.bf16.mxu0 0
    %125 = vmatpush1.bf16.msra.mxu0 0
    %126 = vmatprep.subr.bf16.mxu0 0
    %127 = vmatpush1.bf16.msra.mxu0 0
    %128 = vmatprep.subr.bf16.mxu0 0
    %129 = vmatpush1.bf16.msra.mxu0 0
    %130 = vmatprep.subr.bf16.mxu0 0
    %131 = vmatpush1.bf16.msra.mxu0 0
    %132 = vmatprep.subr.bf16.mxu0 0
    %133 = vmatpush1.bf16.msra.mxu0 0
    %134 = vmatprep.subr.bf16.mxu0 0
    %135 = vmatpush1.bf16.msra.mxu0 0
    %136 = vmatprep.subr.bf16.mxu0 %v65
    %137 = vmatpush1.bf16.msra.mxu0 %v62
    %138 = vmatprep.subr.bf16.mxu0 0
    %139 = vmatpush2.bf16.msra.mxu0 0
    %140 = vmatprep.subr.bf16.mxu0 0
    %141 = vmatpush2.bf16.msra.mxu0 0
    %142 = vmatprep.subr.bf16.mxu0 0
    %143 = vmatpush2.bf16.msra.mxu0 0
    %144 = vmatprep.subr.bf16.mxu0 0
    %145 = vmatpush2.bf16.msra.mxu0 0
    %146 = vmatprep.subr.bf16.mxu0 0
    %147 = vmatpush2.bf16.msra.mxu0 0
    %148 = vmatprep.subr.bf16.mxu0 0
    %149 = vmatpush2.bf16.msra.mxu0 0
    %150 = vmatprep.subr.bf16.mxu0 0
    %151 = vmatpush2.bf16.msra.mxu0 0
    %152 = vmatprep.subr.bf16.mxu0 0
    %153 = vmatpush2.bf16.msra.mxu0 0
    %154 = vmatprep.mubr.bf16.mxu0 0
    %155 = vmatmul.mubr.bf16.gmra.mxu0 %v49
    %v156 = vpop.f32.mrf.mxu0
    %v157 = vadd.f32 %v40, %v156
    %v158 = vpop.f32.mrf.mxu0
    %v159 = vadd.f32 %v40, %v158
    %v160 = vpop.f32.mrf.mxu0
    %v161 = vadd.f32 %v45, %v160
    %v162 = vpop.f32.mrf.mxu0
    %v163 = vadd.f32 %v45, %v162
    %164 = vdwg.mxu0
    %165 = vmatprep.subr.bf16.mxu0 0
    %166 = vmatpush1.bf16.msra.mxu0 0
    %167 = vmatprep.subr.bf16.mxu0 0
    %168 = vmatpush1.bf16.msra.mxu0 0
    %169 = vmatprep.subr.bf16.mxu0 0
    %170 = vmatpush1.bf16.msra.mxu0 0
    %171 = vmatprep.subr.bf16.mxu0 0
    %172 = vmatpush1.bf16.msra.mxu0 0
    %173 = vmatprep.subr.bf16.mxu0 0
    %174 = vmatpush1.bf16.msra.mxu0 0
    %175 = vmatprep.subr.bf16.mxu0 0
    %176 = vmatpush1.bf16.msra.mxu0 0
    %177 = vmatprep.subr.bf16.mxu0 0
    %178 = vmatpush1.bf16.msra.mxu0 0
    %179 = vmatprep.subr.bf16.mxu0 %v71
    %180 = vmatpush1.bf16.msra.mxu0 %v68
    %181 = vmatprep.subr.bf16.mxu0 0
    %182 = vmatpush2.bf16.msra.mxu0 0
    %183 = vmatprep.subr.bf16.mxu0 0
    %184 = vmatpush2.bf16.msra.mxu0 0
    %185 = vmatprep.subr.bf16.mxu0 0
    %186 = vmatpush2.bf16.msra.mxu0 0
    %187 = vmatprep.subr.bf16.mxu0 0
    %188 = vmatpush2.bf16.msra.mxu0 0
    %189 = vmatprep.subr.bf16.mxu0 0
    %190 = vmatpush2.bf16.msra.mxu0 0
    %191 = vmatprep.subr.bf16.mxu0 0
    %192 = vmatpush2.bf16.msra.mxu0 0
    %193 = vmatprep.subr.bf16.mxu0 0
    %194 = vmatpush2.bf16.msra.mxu0 0
    %195 = vmatprep.subr.bf16.mxu0 0
    %196 = vmatpush2.bf16.msra.mxu0 0
    %197 = vmatprep.mubr.bf16.mxu0 0
    %198 = vmatmul.mubr.bf16.gmra.mxu0 %v49
    %v199 = vpop.f32.mrf.mxu0
    %v200 = vadd.f32 %v40, %v199
    %v201 = vpop.f32.mrf.mxu0
    %v202 = vadd.f32 %v40, %v201
    %v203 = vpop.f32.mrf.mxu0
    %v204 = vadd.f32 %v45, %v203
    %v205 = vpop.f32.mrf.mxu0
    %v206 = vadd.f32 %v45, %v205
    %207 = vdwg.mxu0
    %208 = vmatprep.subr.bf16.mxu0 0
    %209 = vmatpush1.bf16.msra.mxu0 0
    %210 = vmatprep.subr.bf16.mxu0 0
    %211 = vmatpush1.bf16.msra.mxu0 0
    %212 = vmatprep.subr.bf16.mxu0 0
    %213 = vmatpush1.bf16.msra.mxu0 0
    %214 = vmatprep.subr.bf16.mxu0 0
    %215 = vmatpush1.bf16.msra.mxu0 0
    %216 = vmatprep.subr.bf16.mxu0 0
    %217 = vmatpush1.bf16.msra.mxu0 0
    %218 = vmatprep.subr.bf16.mxu0 0
    %219 = vmatpush1.bf16.msra.mxu0 0
    %220 = vmatprep.subr.bf16.mxu0 0
    %221 = vmatpush1.bf16.msra.mxu0 0
    %222 = vmatprep.subr.bf16.mxu0 %v77
    %223 = vmatpush1.bf16.msra.mxu0 %v74
    %224 = vmatprep.subr.bf16.mxu0 0
    %225 = vmatpush2.bf16.msra.mxu0 0
    %226 = vmatprep.subr.bf16.mxu0 0
    %227 = vmatpush2.bf16.msra.mxu0 0
    %228 = vmatprep.subr.bf16.mxu0 0
    %229 = vmatpush2.bf16.msra.mxu0 0
    %230 = vmatprep.subr.bf16.mxu0 0
    %231 = vmatpush2.bf16.msra.mxu0 0
    %232 = vmatprep.subr.bf16.mxu0 0
    %233 = vmatpush2.bf16.msra.mxu0 0
    %234 = vmatprep.subr.bf16.mxu0 0
    %235 = vmatpush2.bf16.msra.mxu0 0
    %236 = vmatprep.subr.bf16.mxu0 0
    %237 = vmatpush2.bf16.msra.mxu0 0
    %238 = vmatprep.subr.bf16.mxu0 0
    %239 = vmatpush2.bf16.msra.mxu0 0
    %240 = vmatprep.mubr.bf16.mxu0 0
    %241 = vmatmul.mubr.bf16.gmra.mxu0 %v49
    %v242 = vpop.f32.mrf.mxu0
    %v243 = vadd.f32 %v40, %v242
    %v244 = vpop.f32.mrf.mxu0
    %v245 = vadd.f32 %v40, %v244
    %v246 = vpop.f32.mrf.mxu0
    %v247 = vadd.f32 %v45, %v246
    %v248 = vpop.f32.mrf.mxu0
    %v249 = vadd.f32 %v45, %v248
    %250 = vdwg.mxu0
    %v251 = vmax.f32 %v114, 0.0
    %v252 = vmax.f32 %v116, 0.0
    %v253 = vmax.f32 %v157, 0.0
    %v254 = vmax.f32 %v159, 0.0
    %v255 = vmax.f32 %v200, 0.0
    %v256 = vmax.f32 %v202, 0.0
    %v257 = vmax.f32 %v243, 0.0
    %v258 = vmax.f32 %v245, 0.0
    %v259 = vmax.f32 %v118, 0.0
    %v260 = vmax.f32 %v120, 0.0
    %v261 = vmax.f32 %v161, 0.0
    %v262 = vmax.f32 %v163, 0.0
    %v263 = vmax.f32 %v204, 0.0
    %v264 = vmax.f32 %v206, 0.0
    %v265 = vmax.f32 %v247, 0.0
    %v266 = vmax.f32 %v249, 0.0
    %v267 = vpack.c.bf16 %v259, %v251
    %v268 = vpack.c.bf16 %v260, %v252
    %v269 = vpack.c.bf16 %v261, %v253
    %v270 = vpack.c.bf16 %v262, %v254
    %v271 = vpack.c.bf16 %v263, %v255
    %v272 = vpack.c.bf16 %v264, %v256
    %v273 = vpack.c.bf16 %v265, %v257
    %v274 = vpack.c.bf16 %v266, %v258
    %276 = vset.pattern.permute.xlu0 14
    %277 = vperm.xlu0 %276, %v16
    %v278 = vpop.permute.xlu0 %277
    %281 = vset.pattern.permute.xlu0 14
    %282 = vperm.xlu0 %281, %v17
    %v283 = vpop.permute.xlu0 %282
    %vm285 = vcmask 113664
    %v287 = vsel %vm285, %v18, 0
    %vm289 = vcmask 1046528
    %v291 = vsel %vm289, %v267, 0
    %v294 = vsel %vm289, %v268, 0
    %v297 = vsel %vm289, %v269, 0
    %v300 = vsel %vm289, %v270, 0
    %v303 = vsel %vm289, %v271, 0
    %v306 = vsel %vm289, %v272, 0
    %v309 = vsel %vm289, %v273, 0
    %v312 = vsel %vm289, %v274, 0
    %314 = vmatprep.subr.bf16.mxu0 0
    %315 = vmatpush1.bf16.msra.mxu0 0
    %316 = vmatprep.subr.bf16.mxu0 0
    %317 = vmatpush1.bf16.msra.mxu0 0
    %318 = vmatprep.subr.bf16.mxu0 0
    %319 = vmatpush1.bf16.msra.mxu0 0
    %320 = vmatprep.subr.bf16.mxu0 0
    %321 = vmatpush1.bf16.msra.mxu0 0
    %322 = vmatprep.subr.bf16.mxu0 0
    %323 = vmatpush1.bf16.msra.mxu0 0
    %324 = vmatprep.subr.bf16.mxu0 0
    %325 = vmatpush1.bf16.msra.mxu0 0
    %326 = vmatprep.subr.bf16.mxu0 0
    %327 = vmatpush1.bf16.msra.mxu0 0
    %328 = vmatprep.subr.bf16.mxu0 %v294
    %329 = vmatpush1.bf16.msra.mxu0 %v291
    %330 = vmatprep.subr.bf16.mxu0 0
    %331 = vmatpush2.bf16.msra.mxu0 0
    %332 = vmatprep.subr.bf16.mxu0 0
    %333 = vmatpush2.bf16.msra.mxu0 0
    %334 = vmatprep.subr.bf16.mxu0 0
    %335 = vmatpush2.bf16.msra.mxu0 0
    %336 = vmatprep.subr.bf16.mxu0 0
    %337 = vmatpush2.bf16.msra.mxu0 0
    %338 = vmatprep.subr.bf16.mxu0 0
    %339 = vmatpush2.bf16.msra.mxu0 0
    %340 = vmatprep.subr.bf16.mxu0 0
    %341 = vmatpush2.bf16.msra.mxu0 0
    %342 = vmatprep.subr.bf16.mxu0 0
    %343 = vmatpush2.bf16.msra.mxu0 0
    %344 = vmatprep.subr.bf16.mxu0 0
    %345 = vmatpush2.bf16.msra.mxu0 0
    %346 = vmatprep.mubr.bf16.mxu0 0
    %347 = vmatmul.mubr.bf16.gmra.mxu0 %v287
    %v348 = vpop.f32.mrf.mxu0
    %v349 = vadd.f32 %v278, %v348
    %v350 = vpop.f32.mrf.mxu0
    %v351 = vadd.f32 %v278, %v350
    %v352 = vpop.f32.mrf.mxu0
    %v353 = vadd.f32 %v283, %v352
    %v354 = vpop.f32.mrf.mxu0
    %v355 = vadd.f32 %v283, %v354
    %356 = vdwg.mxu0
    %357 = vmatprep.subr.bf16.mxu0 0
    %358 = vmatpush1.bf16.msra.mxu0 0
    %359 = vmatprep.subr.bf16.mxu0 0
    %360 = vmatpush1.bf16.msra.mxu0 0
    %361 = vmatprep.subr.bf16.mxu0 0
    %362 = vmatpush1.bf16.msra.mxu0 0
    %363 = vmatprep.subr.bf16.mxu0 0
    %364 = vmatpush1.bf16.msra.mxu0 0
    %365 = vmatprep.subr.bf16.mxu0 0
    %366 = vmatpush1.bf16.msra.mxu0 0
    %367 = vmatprep.subr.bf16.mxu0 0
    %368 = vmatpush1.bf16.msra.mxu0 0
    %369 = vmatprep.subr.bf16.mxu0 0
    %370 = vmatpush1.bf16.msra.mxu0 0
    %371 = vmatprep.subr.bf16.mxu0 %v300
    %372 = vmatpush1.bf16.msra.mxu0 %v297
    %373 = vmatprep.subr.bf16.mxu0 0
    %374 = vmatpush2.bf16.msra.mxu0 0
    %375 = vmatprep.subr.bf16.mxu0 0
    %376 = vmatpush2.bf16.msra.mxu0 0
    %377 = vmatprep.subr.bf16.mxu0 0
    %378 = vmatpush2.bf16.msra.mxu0 0
    %379 = vmatprep.subr.bf16.mxu0 0
    %380 = vmatpush2.bf16.msra.mxu0 0
    %381 = vmatprep.subr.bf16.mxu0 0
    %382 = vmatpush2.bf16.msra.mxu0 0
    %383 = vmatprep.subr.bf16.mxu0 0
    %384 = vmatpush2.bf16.msra.mxu0 0
    %385 = vmatprep.subr.bf16.mxu0 0
    %386 = vmatpush2.bf16.msra.mxu0 0
    %387 = vmatprep.subr.bf16.mxu0 0
    %388 = vmatpush2.bf16.msra.mxu0 0
    %389 = vmatprep.mubr.bf16.mxu0 0
    %390 = vmatmul.mubr.bf16.gmra.mxu0 %v287
    %v391 = vpop.f32.mrf.mxu0
    %v392 = vadd.f32 %v278, %v391
    %v393 = vpop.f32.mrf.mxu0
    %v394 = vadd.f32 %v278, %v393
    %v395 = vpop.f32.mrf.mxu0
    %v396 = vadd.f32 %v283, %v395
    %v397 = vpop.f32.mrf.mxu0
    %v398 = vadd.f32 %v283, %v397
    %399 = vdwg.mxu0
    %400 = vmatprep.subr.bf16.mxu0 0
    %401 = vmatpush1.bf16.msra.mxu0 0
    %402 = vmatprep.subr.bf16.mxu0 0
    %403 = vmatpush1.bf16.msra.mxu0 0
    %404 = vmatprep.subr.bf16.mxu0 0
    %405 = vmatpush1.bf16.msra.mxu0 0
    %406 = vmatprep.subr.bf16.mxu0 0
    %407 = vmatpush1.bf16.msra.mxu0 0
    %408 = vmatprep.subr.bf16.mxu0 0
    %409 = vmatpush1.bf16.msra.mxu0 0
    %410 = vmatprep.subr.bf16.mxu0 0
    %411 = vmatpush1.bf16.msra.mxu0 0
    %412 = vmatprep.subr.bf16.mxu0 0
    %413 = vmatpush1.bf16.msra.mxu0 0
    %414 = vmatprep.subr.bf16.mxu0 %v306
    %415 = vmatpush1.bf16.msra.mxu0 %v303
    %416 = vmatprep.subr.bf16.mxu0 0
    %417 = vmatpush2.bf16.msra.mxu0 0
    %418 = vmatprep.subr.bf16.mxu0 0
    %419 = vmatpush2.bf16.msra.mxu0 0
    %420 = vmatprep.subr.bf16.mxu0 0
    %421 = vmatpush2.bf16.msra.mxu0 0
    %422 = vmatprep.subr.bf16.mxu0 0
    %423 = vmatpush2.bf16.msra.mxu0 0
    %424 = vmatprep.subr.bf16.mxu0 0
    %425 = vmatpush2.bf16.msra.mxu0 0
    %426 = vmatprep.subr.bf16.mxu0 0
    %427 = vmatpush2.bf16.msra.mxu0 0
    %428 = vmatprep.subr.bf16.mxu0 0
    %429 = vmatpush2.bf16.msra.mxu0 0
    %430 = vmatprep.subr.bf16.mxu0 0
    %431 = vmatpush2.bf16.msra.mxu0 0
    %432 = vmatprep.mubr.bf16.mxu0 0
    %433 = vmatmul.mubr.bf16.gmra.mxu0 %v287
    %v434 = vpop.f32.mrf.mxu0
    %v435 = vadd.f32 %v278, %v434
    %v436 = vpop.f32.mrf.mxu0
    %v437 = vadd.f32 %v278, %v436
    %v438 = vpop.f32.mrf.mxu0
    %v439 = vadd.f32 %v283, %v438
    %v440 = vpop.f32.mrf.mxu0
    %v441 = vadd.f32 %v283, %v440
    %442 = vdwg.mxu0
    %443 = vmatprep.subr.bf16.mxu0 0
    %444 = vmatpush1.bf16.msra.mxu0 0
    %445 = vmatprep.subr.bf16.mxu0 0
    %446 = vmatpush1.bf16.msra.mxu0 0
    %447 = vmatprep.subr.bf16.mxu0 0
    %448 = vmatpush1.bf16.msra.mxu0 0
    %449 = vmatprep.subr.bf16.mxu0 0
    %450 = vmatpush1.bf16.msra.mxu0 0
    %451 = vmatprep.subr.bf16.mxu0 0
    %452 = vmatpush1.bf16.msra.mxu0 0
    %453 = vmatprep.subr.bf16.mxu0 0
    %454 = vmatpush1.bf16.msra.mxu0 0
    %455 = vmatprep.subr.bf16.mxu0 0
    %456 = vmatpush1.bf16.msra.mxu0 0
    %457 = vmatprep.subr.bf16.mxu0 %v312
    %458 = vmatpush1.bf16.msra.mxu0 %v309
    %459 = vmatprep.subr.bf16.mxu0 0
    %460 = vmatpush2.bf16.msra.mxu0 0
    %461 = vmatprep.subr.bf16.mxu0 0
    %462 = vmatpush2.bf16.msra.mxu0 0
    %463 = vmatprep.subr.bf16.mxu0 0
    %464 = vmatpush2.bf16.msra.mxu0 0
    %465 = vmatprep.subr.bf16.mxu0 0
    %466 = vmatpush2.bf16.msra.mxu0 0
    %467 = vmatprep.subr.bf16.mxu0 0
    %468 = vmatpush2.bf16.msra.mxu0 0
    %469 = vmatprep.subr.bf16.mxu0 0
    %470 = vmatpush2.bf16.msra.mxu0 0
    %471 = vmatprep.subr.bf16.mxu0 0
    %472 = vmatpush2.bf16.msra.mxu0 0
    %473 = vmatprep.subr.bf16.mxu0 0
    %474 = vmatpush2.bf16.msra.mxu0 0
    %475 = vmatprep.mubr.bf16.mxu0 0
    %476 = vmatmul.mubr.bf16.gmra.mxu0 %v287
    %v477 = vpop.f32.mrf.mxu0
    %v478 = vadd.f32 %v278, %v477
    %v479 = vpop.f32.mrf.mxu0
    %v480 = vadd.f32 %v278, %v479
    %v481 = vpop.f32.mrf.mxu0
    %v482 = vadd.f32 %v283, %v481
    %v483 = vpop.f32.mrf.mxu0
    %v484 = vadd.f32 %v283, %v483
    %485 = vdwg.mxu0
    %v486 = vmax.f32 %v349, 0.0
    %v487 = vmax.f32 %v351, 0.0
    %v488 = vmax.f32 %v392, 0.0
    %v489 = vmax.f32 %v394, 0.0
    %v490 = vmax.f32 %v435, 0.0
    %v491 = vmax.f32 %v437, 0.0
    %v492 = vmax.f32 %v478, 0.0
    %v493 = vmax.f32 %v480, 0.0
    %v494 = vmax.f32 %v353, 0.0
    %v495 = vmax.f32 %v355, 0.0
    %v496 = vmax.f32 %v396, 0.0
    %v497 = vmax.f32 %v398, 0.0
    %v498 = vmax.f32 %v439, 0.0
    %v499 = vmax.f32 %v441, 0.0
    %v500 = vmax.f32 %v482, 0.0
    %v501 = vmax.f32 %v484, 0.0
    %v502 = vpack.c.bf16 %v494, %v486
    %v503 = vpack.c.bf16 %v495, %v487
    %v504 = vpack.c.bf16 %v496, %v488
    %v505 = vpack.c.bf16 %v497, %v489
    %v506 = vpack.c.bf16 %v498, %v490
    %v507 = vpack.c.bf16 %v499, %v491
    %v508 = vpack.c.bf16 %v500, %v492
    %v509 = vpack.c.bf16 %v501, %v493
    %511 = vset.pattern.permute.xlu0 14
    %512 = vperm.xlu0 %511, %v19
    %v513 = vpop.permute.xlu0 %512
    %v516 = vsel %vm285, %v20, 0
    %v519 = vsel %vm289, %v502, 0
    %v522 = vsel %vm289, %v503, 0
    %v525 = vsel %vm289, %v504, 0
    %v528 = vsel %vm289, %v505, 0
    %v531 = vsel %vm289, %v506, 0
    %v534 = vsel %vm289, %v507, 0
    %v537 = vsel %vm289, %v508, 0
    %v540 = vsel %vm289, %v509, 0
    %542 = vmatprep.subr.bf16.mxu0 0
    %543 = vmatpush1.bf16.msra.mxu0 0
    %544 = vmatprep.subr.bf16.mxu0 0
    %545 = vmatpush1.bf16.msra.mxu0 0
    %546 = vmatprep.subr.bf16.mxu0 0
    %547 = vmatpush1.bf16.msra.mxu0 0
    %548 = vmatprep.subr.bf16.mxu0 0
    %549 = vmatpush1.bf16.msra.mxu0 0
    %550 = vmatprep.subr.bf16.mxu0 0
    %551 = vmatpush1.bf16.msra.mxu0 0
    %552 = vmatprep.subr.bf16.mxu0 0
    %553 = vmatpush1.bf16.msra.mxu0 0
    %554 = vmatprep.subr.bf16.mxu0 0
    %555 = vmatpush1.bf16.msra.mxu0 0
    %556 = vmatprep.subr.bf16.mxu0 %v522
    %557 = vmatpush1.bf16.msra.mxu0 %v519
    %558 = vmatprep.subr.bf16.mxu0 0
    %559 = vmatpush2.bf16.msra.mxu0 0
    %560 = vmatprep.subr.bf16.mxu0 0
    %561 = vmatpush2.bf16.msra.mxu0 0
    %562 = vmatprep.subr.bf16.mxu0 0
    %563 = vmatpush2.bf16.msra.mxu0 0
    %564 = vmatprep.subr.bf16.mxu0 0
    %565 = vmatpush2.bf16.msra.mxu0 0
    %566 = vmatprep.subr.bf16.mxu0 0
    %567 = vmatpush2.bf16.msra.mxu0 0
    %568 = vmatprep.subr.bf16.mxu0 0
    %569 = vmatpush2.bf16.msra.mxu0 0
    %570 = vmatprep.subr.bf16.mxu0 0
    %571 = vmatpush2.bf16.msra.mxu0 0
    %572 = vmatprep.subr.bf16.mxu0 0
    %573 = vmatpush2.bf16.msra.mxu0 0
    %574 = vmatprep.mubr.bf16.mxu0 0
    %575 = vmatmul.mubr.bf16.gmra.mxu0 %v516
    %v576 = vpop.f32.mrf.mxu0
    %v577 = vadd.f32 %v513, %v576
    %v578 = vpop.f32.mrf.mxu0
    %v579 = vadd.f32 %v513, %v578
    %v580 = vpop.f32.mrf.mxu0
    %v581 = vpop.f32.mrf.mxu0
    %582 = vdwg.mxu0
    %583 = vmatprep.subr.bf16.mxu0 0
    %584 = vmatpush1.bf16.msra.mxu0 0
    %585 = vmatprep.subr.bf16.mxu0 0
    %586 = vmatpush1.bf16.msra.mxu0 0
    %587 = vmatprep.subr.bf16.mxu0 0
    %588 = vmatpush1.bf16.msra.mxu0 0
    %589 = vmatprep.subr.bf16.mxu0 0
    %590 = vmatpush1.bf16.msra.mxu0 0
    %591 = vmatprep.subr.bf16.mxu0 0
    %592 = vmatpush1.bf16.msra.mxu0 0
    %593 = vmatprep.subr.bf16.mxu0 0
    %594 = vmatpush1.bf16.msra.mxu0 0
    %595 = vmatprep.subr.bf16.mxu0 0
    %596 = vmatpush1.bf16.msra.mxu0 0
    %597 = vmatprep.subr.bf16.mxu0 %v528
    %598 = vmatpush1.bf16.msra.mxu0 %v525
    %599 = vmatprep.subr.bf16.mxu0 0
    %600 = vmatpush2.bf16.msra.mxu0 0
    %601 = vmatprep.subr.bf16.mxu0 0
    %602 = vmatpush2.bf16.msra.mxu0 0
    %603 = vmatprep.subr.bf16.mxu0 0
    %604 = vmatpush2.bf16.msra.mxu0 0
    %605 = vmatprep.subr.bf16.mxu0 0
    %606 = vmatpush2.bf16.msra.mxu0 0
    %607 = vmatprep.subr.bf16.mxu0 0
    %608 = vmatpush2.bf16.msra.mxu0 0
    %609 = vmatprep.subr.bf16.mxu0 0
    %610 = vmatpush2.bf16.msra.mxu0 0
    %611 = vmatprep.subr.bf16.mxu0 0
    %612 = vmatpush2.bf16.msra.mxu0 0
    %613 = vmatprep.subr.bf16.mxu0 0
    %614 = vmatpush2.bf16.msra.mxu0 0
    %615 = vmatprep.mubr.bf16.mxu0 0
    %616 = vmatmul.mubr.bf16.gmra.mxu0 %v516
    %v617 = vpop.f32.mrf.mxu0
    %v618 = vadd.f32 %v513, %v617
    %v619 = vpop.f32.mrf.mxu0
    %v620 = vadd.f32 %v513, %v619
    %v621 = vpop.f32.mrf.mxu0
    %v622 = vpop.f32.mrf.mxu0
    %623 = vdwg.mxu0
    %624 = vmatprep.subr.bf16.mxu0 0
    %625 = vmatpush1.bf16.msra.mxu0 0
    %626 = vmatprep.subr.bf16.mxu0 0
    %627 = vmatpush1.bf16.msra.mxu0 0
    %628 = vmatprep.subr.bf16.mxu0 0
    %629 = vmatpush1.bf16.msra.mxu0 0
    %630 = vmatprep.subr.bf16.mxu0 0
    %631 = vmatpush1.bf16.msra.mxu0 0
    %632 = vmatprep.subr.bf16.mxu0 0
    %633 = vmatpush1.bf16.msra.mxu0 0
    %634 = vmatprep.subr.bf16.mxu0 0
    %635 = vmatpush1.bf16.msra.mxu0 0
    %636 = vmatprep.subr.bf16.mxu0 0
    %637 = vmatpush1.bf16.msra.mxu0 0
    %638 = vmatprep.subr.bf16.mxu0 %v534
    %639 = vmatpush1.bf16.msra.mxu0 %v531
    %640 = vmatprep.subr.bf16.mxu0 0
    %641 = vmatpush2.bf16.msra.mxu0 0
    %642 = vmatprep.subr.bf16.mxu0 0
    %643 = vmatpush2.bf16.msra.mxu0 0
    %644 = vmatprep.subr.bf16.mxu0 0
    %645 = vmatpush2.bf16.msra.mxu0 0
    %646 = vmatprep.subr.bf16.mxu0 0
    %647 = vmatpush2.bf16.msra.mxu0 0
    %648 = vmatprep.subr.bf16.mxu0 0
    %649 = vmatpush2.bf16.msra.mxu0 0
    %650 = vmatprep.subr.bf16.mxu0 0
    %651 = vmatpush2.bf16.msra.mxu0 0
    %652 = vmatprep.subr.bf16.mxu0 0
    %653 = vmatpush2.bf16.msra.mxu0 0
    %654 = vmatprep.subr.bf16.mxu0 0
    %655 = vmatpush2.bf16.msra.mxu0 0
    %656 = vmatprep.mubr.bf16.mxu0 0
    %657 = vmatmul.mubr.bf16.gmra.mxu0 %v516
    %v658 = vpop.f32.mrf.mxu0
    %v659 = vadd.f32 %v513, %v658
    %v660 = vpop.f32.mrf.mxu0
    %v661 = vadd.f32 %v513, %v660
    %v662 = vpop.f32.mrf.mxu0
    %v663 = vpop.f32.mrf.mxu0
    %664 = vdwg.mxu0
    %665 = vmatprep.subr.bf16.mxu0 0
    %666 = vmatpush1.bf16.msra.mxu0 0
    %667 = vmatprep.subr.bf16.mxu0 0
    %668 = vmatpush1.bf16.msra.mxu0 0
    %669 = vmatprep.subr.bf16.mxu0 0
    %670 = vmatpush1.bf16.msra.mxu0 0
    %671 = vmatprep.subr.bf16.mxu0 0
    %672 = vmatpush1.bf16.msra.mxu0 0
    %673 = vmatprep.subr.bf16.mxu0 0
    %674 = vmatpush1.bf16.msra.mxu0 0
    %675 = vmatprep.subr.bf16.mxu0 0
    %676 = vmatpush1.bf16.msra.mxu0 0
    %677 = vmatprep.subr.bf16.mxu0 0
    %678 = vmatpush1.bf16.msra.mxu0 0
    %679 = vmatprep.subr.bf16.mxu0 %v540
    %680 = vmatpush1.bf16.msra.mxu0 %v537
    %681 = vmatprep.subr.bf16.mxu0 0
    %682 = vmatpush2.bf16.msra.mxu0 0
    %683 = vmatprep.subr.bf16.mxu0 0
    %684 = vmatpush2.bf16.msra.mxu0 0
    %685 = vmatprep.subr.bf16.mxu0 0
    %686 = vmatpush2.bf16.msra.mxu0 0
    %687 = vmatprep.subr.bf16.mxu0 0
    %688 = vmatpush2.bf16.msra.mxu0 0
    %689 = vmatprep.subr.bf16.mxu0 0
    %690 = vmatpush2.bf16.msra.mxu0 0
    %691 = vmatprep.subr.bf16.mxu0 0
    %692 = vmatpush2.bf16.msra.mxu0 0
    %693 = vmatprep.subr.bf16.mxu0 0
    %694 = vmatpush2.bf16.msra.mxu0 0
    %695 = vmatprep.subr.bf16.mxu0 0
    %696 = vmatpush2.bf16.msra.mxu0 0
    %697 = vmatprep.mubr.bf16.mxu0 0
    %698 = vmatmul.mubr.bf16.gmra.mxu0 %v516
    %v699 = vpop.f32.mrf.mxu0
    %v700 = vadd.f32 %v513, %v699
    %v701 = vpop.f32.mrf.mxu0
    %v702 = vadd.f32 %v513, %v701
    %v703 = vpop.f32.mrf.mxu0
    %v704 = vpop.f32.mrf.mxu0
    %705 = vdwg.mxu0
    %v714 = vcombine.low %v577, %v579
    %v715 = vcombine.low %v618, %v620
    %v716 = vcombine.low %v659, %v661
    %v717 = vcombine.low %v700, %v702
    %722 = vst [vmem:[#allocation2] sm:$0x77] %v714
    %723 = vst [vmem:[#allocation2 + $0x8] sm:$0x77] %v715
    %724 = vst [vmem:[#allocation2 + $0x10] sm:$0x77] %v716
    %725 = vst [vmem:[#allocation2 + $0x18] sm:$0x77] %v717
    // Predicated region
    $region10: #{tpu_custom_call.1} parent=1 // pred_check
      _
    $region11: #{tpu_custom_call.1} parent=1 // pred_check_branch
      %727 = sbr.rel (0) target = $region13
    $region12: #{tpu_custom_call.1} parent=1 // pred_region
      %s729 = ssub.s32 512, 512
      %730 = vsyncadd [#allocation3], %s729
      %s732 = sshll.u32 [#allocation2], 4
      %s733 = int_to_ptr.vmem [resolvable:$true] %s732
      %735 = dma.vmem_to_hbm [thread:$0]  %s733, 512, %s2, [#allocation3]
    $region13: #{tpu_custom_call.1} parent=1 // pred_fallthru
      _
    // Predicated region
    $region14: #{tpu_custom_call.1} parent=1 // pred_check
      _
    $region15: #{tpu_custom_call.1} parent=1 // pred_check_branch
      %737 = sbr.rel (0) target = $region17
    $region16: #{tpu_custom_call.1} parent=1 // pred_region
      %738 = dma.done [#allocation3], 512
    $region17: #{tpu_custom_call.1} parent=1 // pred_fallthru
      _
    %739 = vsyncpa [#allocation3], 1

</llo_original>
